<compile_context>
chip_gen: v5e
topology: v5e:2x2
jax: 0.10.0
libtpu: 0.0.40
codegen_flags: <defaults>
</compile_context>

<pallas_src>
import jax
import jax.numpy as jnp
from jax.experimental import pallas as pl
from jax.experimental.pallas import tpu as pltpu

_MIB = 1024 * 1024


# --------------------------------------------------------------------------
# Kernels
# --------------------------------------------------------------------------
def _dummy_layer_kernel_batch(state_ref, query_ref, patches_ref, pos_ref, out_ref):
    # Blocks: state/query/out (TB,S,D); patches/pos (TB,P,D).
    # Full-f32 compute: upcast once, fused reduce + adds in f32, one cast at store.
    pp = jnp.sum(
        patches_ref[...].astype(jnp.float32) + pos_ref[...].astype(jnp.float32),
        axis=1,
        keepdims=True,
    )  # (TB,1,D) f32
    acc = (state_ref[...].astype(jnp.float32)
           + query_ref[...].astype(jnp.float32)
           + pp)  # (TB,1,D) broadcasts over S == torch .expand(-1, S, -1)
    out_ref[...] = acc.astype(out_ref.dtype)


def _dummy_layer_kernel_seq(state_ref, query_ref, patches_ref, pos_ref, out_ref, pp_ref):
    # Blocks: state/query/out (1,TS,D); patches/pos (1,P,D); pp_ref (1,1,D) f32 scratch.
    # The patch reduction depends only on the batch index -> compute it once per
    # batch element (first S tile) and reuse it for all subsequent S tiles.
    @pl.when(pl.program_id(1) == 0)
    def _():
        pp_ref[...] = jnp.sum(
            patches_ref[...].astype(jnp.float32) + pos_ref[...].astype(jnp.float32),
            axis=1,
            keepdims=True,
        )

    acc = (state_ref[...].astype(jnp.float32)
           + query_ref[...].astype(jnp.float32)
           + pp_ref[...])
    out_ref[...] = acc.astype(out_ref.dtype)


# --------------------------------------------------------------------------
# Tile selection
# --------------------------------------------------------------------------
def _chip_profile():
    """Returns (vmem_limit_bytes, tile_budget_bytes, bytes_per_step_floor, min_steps)."""
    try:
        vmem_cap = int(pltpu.get_tpu_info().vmem_capacity_bytes)
    except Exception:
        vmem_cap = 64 * _MIB  # conservative fallback (smallest generation: v7x)
    vmem_limit = min(vmem_cap * 3 // 4, 96 * _MIB)
    tile_budget = vmem_limit * 2 // 3  # headroom for compiler-internal scratch
    if vmem_cap <= 64 * _MIB:
        # v7x-like: 2 TensorCores, ~3.2 TB/s HBM -> >=2 steps per core and
        # >=16 MiB of HBM traffic per step.
        return vmem_limit, tile_budget, 16 * _MIB, 4
    # v5e/v6e-like: single TensorCore -> a few steps for pipeline overlap,
    # >=8 MiB of HBM traffic per step.
    return vmem_limit, tile_budget, 8 * _MIB, 3


def _pick_batch_tile(B, per_batch_hbm_bytes, per_batch_resident_bytes,
                     tile_budget, bytes_floor, min_steps):
    """Batch-tile size for the batch-tiled path (cdiv grid: tb need not divide B).
    Returns 0 if even a single batch element does not fit the VMEM budget."""
    tb_vmem = tile_budget // max(1, per_batch_resident_bytes)
    if tb_vmem < 1:
        return 0
    tb = min(tb_vmem, B)
    # Keep >= min_steps grid steps (2 per TC on v7x; a few for pipelining on
    # single-TC parts) ...
    if min_steps > 1 and B >= min_steps:
        tb = min(tb, max(1, B // min_steps))
    # ... but never let per-step HBM traffic fall below the floor: the
    # ~0.35us/step overhead must stay a small fraction of step time.
    tb_floor = pl.cdiv(bytes_floor, max(1, per_batch_hbm_bytes))
    tb = max(tb, min(tb_floor, tb_vmem, B))
    return max(1, int(tb))


def _pick_seq_tile(S, P, D, itemsize, tile_budget):
    """S-tile size for the fallback path (tb = 1)."""
    # Double-buffered residents: 3*(1,ts,D) for state/query/out, 2*(1,P,D)
    # for patches/pos, plus the (1,1,D) f32 scratch.
    fixed = 2 * 2 * P * D * itemsize + D * 4
    avail = tile_budget - fixed
    ts = avail // (2 * 3 * D * itemsize) if avail > 0 else 0
    ts = min(int(ts), S)
    if ts < S:
        ts = max(8, (ts // 8) * 8)  # second-last block dim must be a multiple of 8
    # TODO(synk): if even a single (1, P, D) patches block overflows VMEM the
    # patch axis would need tiling too (manual accumulation); not implemented.
    return ts


# --------------------------------------------------------------------------
# Wrapper
# --------------------------------------------------------------------------
def dummy_transformer_layer(state, patches, patches_pos_embed, query, *,
                            donate_state=False,
                            _force_seq_tiling=False, _force_seq_tile=None):
    """state, query: (B, S, D); patches, patches_pos_embed: (B, P, D) -> (B, S, D)."""
    B, S, D = state.shape
    P = patches.shape[1]
    assert query.shape == (B, S, D)
    assert patches.shape == (B, P, D)
    assert patches_pos_embed.shape == (B, P, D)
    itemsize = jnp.dtype(state.dtype).itemsize

    vmem_limit, tile_budget, bytes_floor, min_steps = _chip_profile()

    per_batch_hbm = (3 * S * D + 2 * P * D) * itemsize
    per_batch_resident = 2 * per_batch_hbm  # double-buffered blocks

    cost = pl.CostEstimate(
        flops=int(B * (2 * P * D + 3 * S * D)),
        transcendentals=0,
        bytes_accessed=int(B * per_batch_hbm),
    )
    io_alias = {0: 0} if donate_state else {}
    compiler_kwargs = dict(vmem_limit_bytes=int(vmem_limit))

    tb = 0 if _force_seq_tiling else _pick_batch_tile(
        B, per_batch_hbm, per_batch_resident, tile_budget, bytes_floor, min_steps)

    if tb >= 1:
        # ---------------- Batch-tiled path ----------------
        grid = (pl.cdiv(B, tb),)
        return pl.pallas_call(
            _dummy_layer_kernel_batch,
            out_shape=jax.ShapeDtypeStruct((B, S, D), state.dtype),
            grid_spec=pltpu.PrefetchScalarGridSpec(
                num_scalar_prefetch=0,
                grid=grid,
                in_specs=[
                    pl.BlockSpec((tb, S, D), lambda b: (b, 0, 0)),  # state
                    pl.BlockSpec((tb, S, D), lambda b: (b, 0, 0)),  # query
                    pl.BlockSpec((tb, P, D), lambda b: (b, 0, 0)),  # patches
                    pl.BlockSpec((tb, P, D), lambda b: (b, 0, 0)),  # patches_pos_embed
                ],
                out_specs=pl.BlockSpec((tb, S, D), lambda b: (b, 0, 0)),
            ),
            compiler_params=pltpu.CompilerParams(
                dimension_semantics=("parallel",), **compiler_kwargs),
            cost_estimate=cost,
            input_output_aliases=io_alias,
        )(state, query, patches, patches_pos_embed)

    # ---------------- S-tiled fallback path ----------------
    # One batch element does not fit the VMEM tile budget: tile the sequence
    # axis of state/query/out, keep patches/pos_embed blocks indexed by the
    # batch axis only (DMA'd once per batch element), and cache the fused
    # patch-sum in a f32 VMEM scratch across all S tiles of that element.
    ts = _force_seq_tile if _force_seq_tile is not None else _pick_seq_tile(
        S, P, D, itemsize, tile_budget)
    grid = (B, pl.cdiv(S, ts))
    return pl.pallas_call(
        _dummy_layer_kernel_seq,
        out_shape=jax.ShapeDtypeStruct((B, S, D), state.dtype),
        grid_spec=pltpu.PrefetchScalarGridSpec(
            num_scalar_prefetch=0,
            grid=grid,
            in_specs=[
                pl.BlockSpec((1, ts, D), lambda b, s: (b, s, 0)),  # state
                pl.BlockSpec((1, ts, D), lambda b, s: (b, s, 0)),  # query
                pl.BlockSpec((1, P, D), lambda b, s: (b, 0, 0)),   # patches (per-b DMA)
                pl.BlockSpec((1, P, D), lambda b, s: (b, 0, 0)),   # pos_embed (per-b DMA)
            ],
            out_specs=pl.BlockSpec((1, ts, D), lambda b, s: (b, s, 0)),
            scratch_shapes=[pltpu.VMEM((1, 1, D), jnp.float32)],
        ),
        compiler_params=pltpu.CompilerParams(
            dimension_semantics=("parallel", "arbitrary"), **compiler_kwargs),
        cost_estimate=cost,
        input_output_aliases=io_alias,
    )(state, query, patches, patches_pos_embed)


def _reference(state, patches, patches_pos_embed, query):
    p = jnp.sum(patches, axis=1, keepdims=True)
    pos = jnp.sum(patches_pos_embed, axis=1, keepdims=True)
    return state + query + p + pos


if __name__ == "__main__":
    # Small demo shapes; D a multiple of 128 (lane-dense stores), S a multiple
    # of 8 so the forced S-tiled fallback can use ts=8 with two S steps.
    B, S, P, D = 4, 16, 16, 128  # batch, state/query seq len, patch count, hidden dim

    key = jax.random.PRNGKey(0)
    k_state, k_patches, k_pos, k_query = jax.random.split(key, 4)
    state = jax.random.normal(k_state, (B, S, D), dtype=jnp.float32)
    patches = jax.random.normal(k_patches, (B, P, D), dtype=jnp.float32)
    patches_pos_embed = jax.random.normal(k_pos, (B, P, D), dtype=jnp.float32)
    query = jax.random.normal(k_query, (B, S, D), dtype=jnp.float32)

    ref = _reference(state, patches, patches_pos_embed, query)

    # Default (batch-tiled) path.
    out = jax.block_until_ready(
        dummy_transformer_layer(state, patches, patches_pos_embed, query))
    assert out.shape == (B, S, D)
    assert jnp.allclose(out, ref, atol=1e-5, rtol=1e-5)

    # Also exercise the S-tiled fallback (used when a single batch element
    # would overflow the VMEM tile budget) to validate it at small shapes.
    out_seq = jax.block_until_ready(
        dummy_transformer_layer(state, patches, patches_pos_embed, query,
                                _force_seq_tiling=True, _force_seq_tile=8))
    assert jnp.allclose(out_seq, ref, atol=1e-5, rtol=1e-5)

    print("KERNEL_OK")
</pallas_src>

<mosaic_0001>
module attributes {stable_mosaic.version = 11 : i64} {
  func.func @_dummy_layer_kernel_batch(%arg0: i32, %arg1: memref<4x16x128xf32, #tpu.memory_space<vmem>>, %arg2: memref<4x16x128xf32, #tpu.memory_space<vmem>>, %arg3: memref<4x16x128xf32, #tpu.memory_space<vmem>>, %arg4: memref<4x16x128xf32, #tpu.memory_space<vmem>>, %arg5: memref<4x16x128xf32, #tpu.memory_space<vmem>>) attributes {dimension_semantics = [#tpu.dimension_semantics<parallel>], iteration_bounds = array<i64: 1>, scalar_prefetch = 0 : i64, scratch_operands = 0 : i64, tpu.core_type = #tpu.core_type<tc>, window_params = [{transform_indices = @transform_0, window_bounds = array<i64: 4, 16, 128>}, {transform_indices = @transform_1, window_bounds = array<i64: 4, 16, 128>}, {transform_indices = @transform_2, window_bounds = array<i64: 4, 16, 128>}, {transform_indices = @transform_3, window_bounds = array<i64: 4, 16, 128>}, {transform_indices = @transform_4, window_bounds = array<i64: 4, 16, 128>}]} {
    %c0 = arith.constant 0 : index
    %c0_0 = arith.constant 0 : index
    %c0_1 = arith.constant 0 : index
    %0 = vector.load %arg3[%c0, %c0_0, %c0_1] : memref<4x16x128xf32, #tpu.memory_space<vmem>>, vector<4x16x128xf32>
    %c0_2 = arith.constant 0 : index
    %c0_3 = arith.constant 0 : index
    %c0_4 = arith.constant 0 : index
    %1 = vector.load %arg4[%c0_2, %c0_3, %c0_4] : memref<4x16x128xf32, #tpu.memory_space<vmem>>, vector<4x16x128xf32>
    %2 = arith.addf %0, %1 : vector<4x16x128xf32>
    %cst = arith.constant dense<0.000000e+00> : vector<4x128xf32>
    %3 = vector.multi_reduction <add>, %2, %cst [1] : vector<4x16x128xf32> to vector<4x128xf32>
    %4 = vector.shape_cast %3 : vector<4x128xf32> to vector<4x1x128xf32>
    %c0_5 = arith.constant 0 : index
    %c0_6 = arith.constant 0 : index
    %c0_7 = arith.constant 0 : index
    %5 = vector.load %arg1[%c0_5, %c0_6, %c0_7] : memref<4x16x128xf32, #tpu.memory_space<vmem>>, vector<4x16x128xf32>
    %c0_8 = arith.constant 0 : index
    %c0_9 = arith.constant 0 : index
    %c0_10 = arith.constant 0 : index
    %6 = vector.load %arg2[%c0_8, %c0_9, %c0_10] : memref<4x16x128xf32, #tpu.memory_space<vmem>>, vector<4x16x128xf32>
    %7 = arith.addf %5, %6 : vector<4x16x128xf32>
    %8 = vector.broadcast %4 : vector<4x1x128xf32> to vector<4x16x128xf32>
    %9 = arith.addf %7, %8 : vector<4x16x128xf32>
    %c0_11 = arith.constant 0 : index
    %c0_12 = arith.constant 0 : index
    %c0_13 = arith.constant 0 : index
    %10 = vector.load %arg5[%c0_11, %c0_12, %c0_13] : memref<4x16x128xf32, #tpu.memory_space<vmem>>, vector<4x16x128xf32>
    tpu.vector_store %arg5[%c0_11, %c0_12, %c0_13], %9 {strides = array<i32>} : memref<4x16x128xf32, #tpu.memory_space<vmem>>, vector<4x16x128xf32>,
    return
  }
  func.func @transform_0(%arg0: i32) -> (i32, i32, i32) {
    %c0_i32 = arith.constant 0 : i32
    %c0_i32_0 = arith.constant 0 : i32
    %c0_i32_1 = arith.constant 0 : i32
    return %arg0, %c0_i32, %c0_i32_0 : i32, i32, i32
  }
  func.func @transform_1(%arg0: i32) -> (i32, i32, i32) {
    %c0_i32 = arith.constant 0 : i32
    %c0_i32_0 = arith.constant 0 : i32
    %c0_i32_1 = arith.constant 0 : i32
    return %arg0, %c0_i32, %c0_i32_0 : i32, i32, i32
  }
  func.func @transform_2(%arg0: i32) -> (i32, i32, i32) {
    %c0_i32 = arith.constant 0 : i32
    %c0_i32_0 = arith.constant 0 : i32
    %c0_i32_1 = arith.constant 0 : i32
    return %arg0, %c0_i32, %c0_i32_0 : i32, i32, i32
  }
  func.func @transform_3(%arg0: i32) -> (i32, i32, i32) {
    %c0_i32 = arith.constant 0 : i32
    %c0_i32_0 = arith.constant 0 : i32
    %c0_i32_1 = arith.constant 0 : i32
    return %arg0, %c0_i32, %c0_i32_0 : i32, i32, i32
  }
  func.func @transform_4(%arg0: i32) -> (i32, i32, i32) {
    %c0_i32 = arith.constant 0 : i32
    %c0_i32_0 = arith.constant 0 : i32
    %c0_i32_1 = arith.constant 0 : i32
    return %arg0, %c0_i32, %c0_i32_0 : i32, i32, i32
  }
}

</mosaic_0001>

<llo_original>
// kernel: tpu_custom_call.1
$region0: #{tpu_custom_call.1}
  #allocation0 [shape = 'u32[]', space=smem, size = 0x4, offset = 0x4, fixed_abs, tag = 'smem constant byte address 0x4 - core index']
  #allocation1 [shape = 'u32[72,128]{1,0:T(1,128)}', space=vmem, size = 0x9000, scoped, tag = 'internal scratch']
  %s0 = inlined_call_operand.hbm [shape: f32[4,16,128], index: 0, kind: input, shape index: {}]
  %s1 = inlined_call_operand.hbm [shape: f32[4,16,128], index: 1, kind: input, shape index: {}]
  %s2 = inlined_call_operand.hbm [shape: f32[4,16,128], index: 2, kind: input, shape index: {}]
  %s3 = inlined_call_operand.hbm [shape: f32[4,16,128], index: 3, kind: input, shape index: {}]
  %s4 = inlined_call_operand.hbm [shape: f32[4,16,128], index: 4, kind: output, shape index: {}]
  %s5 = sld [smem:[#allocation0]]
  $region42: #{tpu_custom_call.1} parent=0
    _
  %s7 = ssub.s32 1, %s5
  %s8 = scalar_select 0, %s7, %s5
  $region1: #{tpu_custom_call.1} parent=0
    #allocation2 [shape = 'u8[32768]{0}', space=vmem, size = 0x8000, scoped, tag = 'input window, operand 0, single buffered']
    #allocation3 [shape = 's32[1]{0}', space=sflag, size = 0x4, scoped, tag = 'scoped memory for tpu_custom_call.1']
    #allocation4 [shape = 's32[1]{0}', space=sflag, size = 0x4, scoped, tag = 'scoped memory for tpu_custom_call.1']
    #allocation5 [shape = 'u8[32768]{0}', space=vmem, size = 0x8000, scoped, tag = 'input window, operand 1, single buffered']
    #allocation6 [shape = 's32[1]{0}', space=sflag, size = 0x4, scoped, tag = 'scoped memory for tpu_custom_call.1']
    #allocation7 [shape = 'u8[32768]{0}', space=vmem, size = 0x8000, scoped, tag = 'input window, operand 2, single buffered']
    #allocation8 [shape = 'u8[32768]{0}', space=vmem, size = 0x8000, scoped, tag = 'input window, operand 3, single buffered']
    #allocation9 [shape = 's32[1]{0}', space=sflag, size = 0x4, scoped, tag = 'scoped memory for tpu_custom_call.1']
    #allocation10 [shape = 'u8[32768]{0}', space=vmem, size = 0x8000, scoped, tag = 'output window, operand 0, single buffered']
    %9 = vsyncpa [#allocation3], 0
    %10 = vsyncpa [#allocation6], 0
    %11 = vsyncpa [#allocation9], 0
    %12 = vsyncpa [#allocation4], 0
    // Predicated region
    $region2: #{tpu_custom_call.1} parent=1 // pred_check
      _
    $region3: #{tpu_custom_call.1} parent=1 // pred_check_branch
      %14 = sbr.rel (0) target = $region5
    $region4: #{tpu_custom_call.1} parent=1 // pred_region
      %16 = vsyncadd [#allocation3], 0
      %s17 = sshll.u32 %s0, 4
      %s18 = int_to_ptr.hbm [resolvable:$true] %s17
      %s19 = sshll.u32 [#allocation2], 4
      %s20 = int_to_ptr.vmem [resolvable:$true] %s19
      %25 = dma.hbm_to_vmem [thread:$0]  %s18, 1024, %s20, [#allocation3], 128, 128, 8
    $region5: #{tpu_custom_call.1} parent=1 // pred_fallthru
      _
    // Predicated region
    $region6: #{tpu_custom_call.1} parent=1 // pred_check
      _
    $region7: #{tpu_custom_call.1} parent=1 // pred_check_branch
      %27 = sbr.rel (0) target = $region9
    $region8: #{tpu_custom_call.1} parent=1 // pred_region
      %29 = vsyncadd [#allocation6], 0
      %s30 = sshll.u32 %s1, 4
      %s31 = int_to_ptr.hbm [resolvable:$true] %s30
      %s32 = sshll.u32 [#allocation5], 4
      %s33 = int_to_ptr.vmem [resolvable:$true] %s32
      %38 = dma.hbm_to_vmem [thread:$0]  %s31, 1024, %s33, [#allocation6], 128, 128, 8
    $region9: #{tpu_custom_call.1} parent=1 // pred_fallthru
      _
    // Predicated region
    $region10: #{tpu_custom_call.1} parent=1 // pred_check
      _
    $region11: #{tpu_custom_call.1} parent=1 // pred_check_branch
      %40 = sbr.rel (0) target = $region13
    $region12: #{tpu_custom_call.1} parent=1 // pred_region
      %42 = vsyncadd [#allocation6], 0
      %s43 = sshll.u32 %s2, 4
      %s44 = int_to_ptr.hbm [resolvable:$true] %s43
      %s45 = sshll.u32 [#allocation7], 4
      %s46 = int_to_ptr.vmem [resolvable:$true] %s45
      %51 = dma.hbm_to_vmem [thread:$0]  %s44, 1024, %s46, [#allocation6], 128, 128, 8
    $region13: #{tpu_custom_call.1} parent=1 // pred_fallthru
      _
    // Predicated region
    $region14: #{tpu_custom_call.1} parent=1 // pred_check
      _
    $region15: #{tpu_custom_call.1} parent=1 // pred_check_branch
      %53 = sbr.rel (0) target = $region17
    $region16: #{tpu_custom_call.1} parent=1 // pred_region
      %55 = vsyncadd [#allocation9], 0
      %s56 = sshll.u32 %s3, 4
      %s57 = int_to_ptr.hbm [resolvable:$true] %s56
      %s58 = sshll.u32 [#allocation8], 4
      %s59 = int_to_ptr.vmem [resolvable:$true] %s58
      %64 = dma.hbm_to_vmem [thread:$0]  %s57, 1024, %s59, [#allocation9], 128, 128, 8
    $region17: #{tpu_custom_call.1} parent=1 // pred_fallthru
      _
    // Predicated region
    $region18: #{tpu_custom_call.1} parent=1 // pred_check
      _
    $region19: #{tpu_custom_call.1} parent=1 // pred_check_branch
      %66 = sbr.rel (0) target = $region21
    $region20: #{tpu_custom_call.1} parent=1 // pred_region
      %68 = dma.done [#allocation3], 1024
    $region21: #{tpu_custom_call.1} parent=1 // pred_fallthru
      _
    // Predicated region
    $region22: #{tpu_custom_call.1} parent=1 // pred_check
      _
    $region23: #{tpu_custom_call.1} parent=1 // pred_check_branch
      %70 = sbr.rel (0) target = $region25
    $region24: #{tpu_custom_call.1} parent=1 // pred_region
      %72 = dma.done [#allocation6], 1024
    $region25: #{tpu_custom_call.1} parent=1 // pred_fallthru
      _
    // Predicated region
    $region26: #{tpu_custom_call.1} parent=1 // pred_check
      _
    $region27: #{tpu_custom_call.1} parent=1 // pred_check_branch
      %74 = sbr.rel (0) target = $region29
    $region28: #{tpu_custom_call.1} parent=1 // pred_region
      %76 = dma.done [#allocation6], 1024
    $region29: #{tpu_custom_call.1} parent=1 // pred_fallthru
      _
    // Predicated region
    $region30: #{tpu_custom_call.1} parent=1 // pred_check
      _
    $region31: #{tpu_custom_call.1} parent=1 // pred_check_branch
      %78 = sbr.rel (0) target = $region33
    $region32: #{tpu_custom_call.1} parent=1 // pred_region
      %80 = dma.done [#allocation9], 1024
    $region33: #{tpu_custom_call.1} parent=1 // pred_fallthru
      _
    %v81 = vld [vmem:[#allocation7] sm:$0xff]
    %v82 = vld [vmem:[#allocation7 + $0x8] sm:$0xff]
    %v83 = vld [vmem:[#allocation7 + $0x10] sm:$0xff]
    %v84 = vld [vmem:[#allocation7 + $0x18] sm:$0xff]
    %v85 = vld [vmem:[#allocation7 + $0x20] sm:$0xff]
    %v86 = vld [vmem:[#allocation7 + $0x28] sm:$0xff]
    %v87 = vld [vmem:[#allocation7 + $0x30] sm:$0xff]
    %v88 = vld [vmem:[#allocation7 + $0x38] sm:$0xff]
    %v89 = vld [vmem:[#allocation8] sm:$0xff]
    %v90 = vld [vmem:[#allocation8 + $0x8] sm:$0xff]
    %v91 = vld [vmem:[#allocation8 + $0x10] sm:$0xff]
    %v92 = vld [vmem:[#allocation8 + $0x18] sm:$0xff]
    %v93 = vld [vmem:[#allocation8 + $0x20] sm:$0xff]
    %v94 = vld [vmem:[#allocation8 + $0x28] sm:$0xff]
    %v95 = vld [vmem:[#allocation8 + $0x30] sm:$0xff]
    %v96 = vld [vmem:[#allocation8 + $0x38] sm:$0xff]
    %v97 = vadd.f32 %v81, %v89
    %v98 = vadd.f32 %v82, %v90
    %v99 = vadd.f32 %v83, %v91
    %v100 = vadd.f32 %v84, %v92
    %v101 = vadd.f32 %v85, %v93
    %v102 = vadd.f32 %v86, %v94
    %v103 = vadd.f32 %v87, %v95
    %v104 = vadd.f32 %v88, %v96
    %v105 = vadd.f32 %v97, %v98
    %v106 = vrot.slane %v105, 4
    %v107 = vadd.f32 %v105, %v106
    %v108 = vrot.slane %v107, 2
    %v109 = vadd.f32 %v107, %v108
    %v110 = vrot.slane %v109, 1
    %v111 = vadd.f32 %v109, %v110
    %v112 = vadd.f32 %v99, %v100
    %v113 = vrot.slane %v112, 4
    %v114 = vadd.f32 %v112, %v113
    %v115 = vrot.slane %v114, 2
    %v116 = vadd.f32 %v114, %v115
    %v117 = vrot.slane %v116, 1
    %v118 = vadd.f32 %v116, %v117
    %v119 = vadd.f32 %v101, %v102
    %v120 = vrot.slane %v119, 4
    %v121 = vadd.f32 %v119, %v120
    %v122 = vrot.slane %v121, 2
    %v123 = vadd.f32 %v121, %v122
    %v124 = vrot.slane %v123, 1
    %v125 = vadd.f32 %v123, %v124
    %v126 = vadd.f32 %v103, %v104
    %v127 = vrot.slane %v126, 4
    %v128 = vadd.f32 %v126, %v127
    %v129 = vrot.slane %v128, 2
    %v130 = vadd.f32 %v128, %v129
    %v131 = vrot.slane %v130, 1
    %v132 = vadd.f32 %v130, %v131
    %v133 = vld [vmem:[#allocation2] sm:$0xff]
    %v134 = vld [vmem:[#allocation2 + $0x8] sm:$0xff]
    %v135 = vld [vmem:[#allocation2 + $0x10] sm:$0xff]
    %v136 = vld [vmem:[#allocation2 + $0x18] sm:$0xff]
    %v137 = vld [vmem:[#allocation2 + $0x20] sm:$0xff]
    %v138 = vld [vmem:[#allocation2 + $0x28] sm:$0xff]
    %v139 = vld [vmem:[#allocation2 + $0x30] sm:$0xff]
    %v140 = vld [vmem:[#allocation2 + $0x38] sm:$0xff]
    %v141 = vld [vmem:[#allocation5] sm:$0xff]
    %v142 = vld [vmem:[#allocation5 + $0x8] sm:$0xff]
    %v143 = vld [vmem:[#allocation5 + $0x10] sm:$0xff]
    %v144 = vld [vmem:[#allocation5 + $0x18] sm:$0xff]
    %v145 = vld [vmem:[#allocation5 + $0x20] sm:$0xff]
    %v146 = vld [vmem:[#allocation5 + $0x28] sm:$0xff]
    %v147 = vld [vmem:[#allocation5 + $0x30] sm:$0xff]
    %v148 = vld [vmem:[#allocation5 + $0x38] sm:$0xff]
    %v149 = vadd.f32 %v133, %v141
    %v150 = vadd.f32 %v134, %v142
    %v151 = vadd.f32 %v135, %v143
    %v152 = vadd.f32 %v136, %v144
    %v153 = vadd.f32 %v137, %v145
    %v154 = vadd.f32 %v138, %v146
    %v155 = vadd.f32 %v139, %v147
    %v156 = vadd.f32 %v140, %v148
    %v157 = vadd.f32 %v149, %v111
    %v158 = vadd.f32 %v150, %v111
    %v159 = vadd.f32 %v151, %v118
    %v160 = vadd.f32 %v152, %v118
    %v161 = vadd.f32 %v153, %v125
    %v162 = vadd.f32 %v154, %v125
    %v163 = vadd.f32 %v155, %v132
    %v164 = vadd.f32 %v156, %v132
    %165 = vst [vmem:[#allocation10] sm:$0xff] %v157
    %166 = vst [vmem:[#allocation10 + $0x8] sm:$0xff] %v158
    %167 = vst [vmem:[#allocation10 + $0x10] sm:$0xff] %v159
    %168 = vst [vmem:[#allocation10 + $0x18] sm:$0xff] %v160
    %169 = vst [vmem:[#allocation10 + $0x20] sm:$0xff] %v161
    %170 = vst [vmem:[#allocation10 + $0x28] sm:$0xff] %v162
    %171 = vst [vmem:[#allocation10 + $0x30] sm:$0xff] %v163
    %172 = vst [vmem:[#allocation10 + $0x38] sm:$0xff] %v164
    // Predicated region
    $region34: #{tpu_custom_call.1} parent=1 // pred_check
      _
    $region35: #{tpu_custom_call.1} parent=1 // pred_check_branch
      %174 = sbr.rel (0) target = $region37
    $region36: #{tpu_custom_call.1} parent=1 // pred_region
      %176 = vsyncadd [#allocation4], 0
      %s177 = sshll.u32 [#allocation10], 4
      %s178 = int_to_ptr.vmem [resolvable:$true] %s177
      %s179 = sshll.u32 %s4, 4
      %s180 = int_to_ptr.hbm [resolvable:$true] %s179
      %185 = dma.vmem_to_hbm [thread:$0]  %s178, 1024, %s180, [#allocation4], 128, 128, 8
    $region37: #{tpu_custom_call.1} parent=1 // pred_fallthru
      _
    // Predicated region
    $region38: #{tpu_custom_call.1} parent=1 // pred_check
      _
    $region39: #{tpu_custom_call.1} parent=1 // pred_check_branch
      %187 = sbr.rel (0) target = $region41
    $region40: #{tpu_custom_call.1} parent=1 // pred_region
      %189 = dma.done [#allocation4], 1024
    $region41: #{tpu_custom_call.1} parent=1 // pred_fallthru
      _
    %190 = vsyncpa [#allocation3], 1
    %191 = vsyncpa [#allocation6], 1
    %192 = vsyncpa [#allocation9], 1
    %193 = vsyncpa [#allocation4], 1

</llo_original>
